<compile_context>
chip_gen: v7x
topology: tpu7x:2x2x1
jax: 0.10.0
libtpu: 0.0.40
codegen_flags: <defaults>
</compile_context>

<pallas_src>
from typing import Any, NamedTuple

import jax
import jax.numpy as jnp
import numpy as np
from jax import lax
from jax.experimental import pallas as pl
from jax.experimental.pallas import tpu as pltpu

LN_EPS = 1e-5          # torch.nn.LayerNorm default
LANE_ALIGN = 256       # 256-wide MXU output tiles on v6e/v7x (multiple of 128 -> v5e OK)
MIN_ROW_STEPS = 4      # >=2 for v7x megacore, >=4 so double-buffering actually overlaps


def _round_up(n, m):
    return ((n + m - 1) // m) * m


def _vmem_budget_bytes():
    """~80% of this generation's physical VMEM (headroom for compiler scratch)."""
    try:
        cap = int(pltpu.get_tpu_info().vmem_capacity_bytes)
    except Exception:
        cap = 64 << 20   # conservative fallback (v7x per-core size)
    return max(int(cap * 0.8), 16 << 20)


class FFNParams(NamedTuple):
    w1: Any       # (dmp, dfp) compute_dtype, zero-padded
    b1: Any       # (1, dfp)   f32
    gamma: Any    # (1, dfp)   compute_dtype
    beta: Any     # (1, dfp)   compute_dtype
    w2: Any       # (dfp, dmp) compute_dtype, zero-padded
    b2: Any       # (1, dmp)   f32
    d_model: int
    d_ff: int
    compute_dtype: Any


def prepare_ffn_params(w1, b1, gamma, beta, w2, b2, *, compute_dtype=jnp.bfloat16):
    """Pad + cast parameters ONCE (hoisted out of the per-forward path)."""
    d_model, d_ff = w1.shape
    dmp = _round_up(d_model, LANE_ALIGN)
    dfp = _round_up(d_ff, LANE_ALIGN)
    w1p = jnp.pad(w1, ((0, dmp - d_model), (0, dfp - d_ff))).astype(compute_dtype)
    w2p = jnp.pad(w2, ((0, dfp - d_ff), (0, dmp - d_model))).astype(compute_dtype)
    b1p = jnp.pad(b1, (0, dfp - d_ff)).reshape(1, dfp).astype(jnp.float32)
    gp = jnp.pad(gamma, (0, dfp - d_ff)).reshape(1, dfp).astype(compute_dtype)
    bep = jnp.pad(beta, (0, dfp - d_ff)).reshape(1, dfp).astype(compute_dtype)
    b2p = jnp.pad(b2, (0, dmp - d_model)).reshape(1, dmp).astype(jnp.float32)
    return FFNParams(w1p, b1p, gp, bep, w2p, b2p, int(d_model), int(d_ff), compute_dtype)


# ----------------------------------------------------------------------------------
# Kernels
# ----------------------------------------------------------------------------------
def _make_resident_kernel(d_ff_real, compute_dtype):
    """Whole W1/W2 resident in VMEM; one grid axis over row tiles."""
    inv_dff = 1.0 / float(d_ff_real)

    def kernel(x_ref, w1_ref, b1_ref, g_ref, beta_ref, w2_ref, b2_ref, o_ref):
        # Cast in-kernel (VPU, hidden under the MXU) -> no wrapper-side HBM cast pass.
        x = x_ref[...].astype(compute_dtype)
        h = jnp.dot(x, w1_ref[...], preferred_element_type=jnp.float32) + b1_ref[...]

        # LayerNorm stats over the real d_ff columns (padded cols of h are exactly 0).
        s1 = jnp.sum(h, axis=-1, keepdims=True)
        s2 = jnp.sum(h * h, axis=-1, keepdims=True)
        mu = s1 * inv_dff
        var = s2 * inv_dff - mu * mu

        # Center/scale in f32; affine + ReLU in compute_dtype (2x packed VPU on v6e/v7x
        # when bf16).  Padded cols stay 0 because gamma=beta=0 there.
        hn = ((h - mu) * lax.rsqrt(var + LN_EPS)).astype(compute_dtype)
        hn = jnp.maximum(hn * g_ref[...] + beta_ref[...], 0.0)

        out = jnp.dot(hn, w2_ref[...], preferred_element_type=jnp.float32) + b2_ref[...]
        o_ref[...] = out.astype(o_ref.dtype)

    return kernel


def _make_chunked_kernel(d_ff_real, compute_dtype, n_chunks):
    """d_ff-streaming path: grid axis j of length 2*K.

    Phase 1 (j <  K): stream W1 chunk j   -> h chunk into VMEM scratch, accumulate s1/s2.
    Phase 2 (j >= K): stream W2 chunk j-K -> normalize+affine+ReLU+matmul2 into acc.
    Output written at j == 2K-1.
    """
    inv_dff = 1.0 / float(d_ff_real)
    K = int(n_chunks)

    def kernel(x_ref, w1_ref, b1_ref, g_ref, beta_ref, w2_ref, b2_ref, o_ref,
               h_scr, s1_scr, s2_scr, acc_scr):
        j = pl.program_id(1)

        @pl.when(j == 0)
        def _init():
            s1_scr[...] = jnp.zeros_like(s1_scr)
            s2_scr[...] = jnp.zeros_like(s2_scr)
            acc_scr[...] = jnp.zeros_like(acc_scr)

        @pl.when(j < K)
        def _phase1():
            jc = jnp.minimum(j, K - 1)
            x = x_ref[...].astype(compute_dtype)
            hc = jnp.dot(x, w1_ref[...], preferred_element_type=jnp.float32) + b1_ref[...]
            s1_scr[...] += jnp.sum(hc, axis=-1, keepdims=True)
            s2_scr[...] += jnp.sum(hc * hc, axis=-1, keepdims=True)
            h_scr[jc] = hc.astype(h_scr.dtype)

        @pl.when(j >= K)
        def _phase2():
            jc = jnp.maximum(j - K, 0)
            hc = h_scr[jc].astype(jnp.float32)
            mu = s1_scr[...] * inv_dff
            var = s2_scr[...] * inv_dff - mu * mu
            hn = ((hc - mu) * lax.rsqrt(var + LN_EPS)).astype(compute_dtype)
            hn = jnp.maximum(hn * g_ref[...] + beta_ref[...], 0.0)
            acc_scr[...] += jnp.dot(hn, w2_ref[...], preferred_element_type=jnp.float32)

        @pl.when(j == 2 * K - 1)
        def _fin():
            o_ref[...] = (acc_scr[...] + b2_ref[...]).astype(o_ref.dtype)

    return kernel


# ----------------------------------------------------------------------------------
# VMEM estimates
# ----------------------------------------------------------------------------------
def _resident_vmem_estimate(tm, dmp, dfp, cb, xb, ob):
    return (2 * tm * dmp * xb                     # x tiles (double-buffered)
            + 2 * tm * dmp * ob                   # out tiles (double-buffered)
            + 2 * dmp * dfp * cb                  # W1 + W2 (single-buffered)
            + dfp * 4 + 2 * dfp * cb + dmp * 4    # b1 (f32), gamma/beta, b2 (f32)
            + 2 * tm * dfp * 4                    # h and h*h temporaries (f32)
            + tm * dfp * cb)                      # hn (compute dtype)


def _chunked_vmem_estimate(tm, dmp, dfp, dcf, cb, xb, ob):
    return (2 * tm * dmp * xb                     # x tiles
            + 2 * tm * dmp * ob                   # out tiles
            + 4 * dmp * dcf * cb                  # W1 + W2 chunks, double-buffered
            + 2 * (dcf * 4 + 2 * dcf * cb) + dmp * 4   # b1/gamma/beta chunks, b2
            + tm * dfp * cb                       # h scratch (all chunks)
            + tm * dmp * 4 + 2 * tm * 4           # acc + s1 + s2
            + 2 * tm * dcf * 4 + tm * dcf * cb)   # per-step hc, hc*hc, hn


# ----------------------------------------------------------------------------------
# Forward
# ----------------------------------------------------------------------------------
def position_feed_forward_1d(x, params: FFNParams, *, row_tile=256,
                             d_ff_chunk=None, out_dtype=None):
    """x: [B, S, d_model].  params: from prepare_ffn_params().  Returns [B, S, d_model]."""
    B, S, d_model = x.shape
    assert d_model == params.d_model, "x feature dim does not match params"
    d_ff = params.d_ff
    compute_dtype = params.compute_dtype
    out_dtype = x.dtype if out_dtype is None else out_dtype
    N = B * S

    dmp, dfp = params.w1.shape

    # Row tile: large for MXU M-dim utilization, but guarantee >= MIN_ROW_STEPS grid
    # steps (when N allows) so the v7x megacore + x/out double-buffering get used.
    n_rows8 = _round_up(max(N, 1), 8)
    if n_rows8 >= MIN_ROW_STEPS * 8:
        tm_cap = max(8, (n_rows8 // MIN_ROW_STEPS) // 8 * 8)
    else:
        tm_cap = n_rows8
    tm = min(_round_up(row_tile, 8), tm_cap, n_rows8)
    Np = _round_up(N, tm)

    xb = np.dtype(x.dtype).itemsize
    cb = np.dtype(compute_dtype).itemsize
    ob = np.dtype(out_dtype).itemsize
    budget = _vmem_budget_bytes()

    # Activations stay in their input dtype (cast happens in-kernel); pad only if needed.
    x2d = x.reshape(N, d_model)
    if (Np - N) or (dmp - d_model):
        x2d = jnp.pad(x2d, ((0, Np - N), (0, dmp - d_model)))

    single = dict(pipeline_mode=pl.Buffered(buffer_count=1))
    est_resident = _resident_vmem_estimate(tm, dmp, dfp, cb, xb, ob)
    use_resident = (d_ff_chunk is None
                    and int(est_resident * 1.25) + (2 << 20) <= budget)

    if use_resident:
        vmem_limit = min(budget, max(int(est_resident * 1.25) + (2 << 20), 16 << 20))
        out2d = pl.pallas_call(
            _make_resident_kernel(d_ff, compute_dtype),
            out_shape=jax.ShapeDtypeStruct((Np, dmp), out_dtype),
            grid_spec=pltpu.PrefetchScalarGridSpec(
                num_scalar_prefetch=0,
                grid=(Np // tm,),
                in_specs=[
                    pl.BlockSpec((tm, dmp), lambda i: (i, 0)),               # x rows
                    pl.BlockSpec((dmp, dfp), lambda i: (0, 0), **single),    # W1
                    pl.BlockSpec((1, dfp), lambda i: (0, 0), **single),      # b1
                    pl.BlockSpec((1, dfp), lambda i: (0, 0), **single),      # gamma
                    pl.BlockSpec((1, dfp), lambda i: (0, 0), **single),      # beta
                    pl.BlockSpec((dfp, dmp), lambda i: (0, 0), **single),    # W2
                    pl.BlockSpec((1, dmp), lambda i: (0, 0), **single),      # b2
                ],
                out_specs=pl.BlockSpec((tm, dmp), lambda i: (i, 0)),
            ),
            compiler_params=pltpu.CompilerParams(
                dimension_semantics=("parallel",),
                vmem_limit_bytes=vmem_limit,
            ),
        )(x2d, params.w1, params.b1, params.gamma, params.beta, params.w2, params.b2)
    else:
        # ---- d_ff-streaming path (weights don't fit, or user forced a chunk) -----
        if d_ff_chunk is not None:
            dcf = min(_round_up(max(int(d_ff_chunk), LANE_ALIGN), LANE_ALIGN), dfp)
            while dfp % dcf:
                dcf += LANE_ALIGN
        else:
            dcf = LANE_ALIGN
            for d in range(dfp // LANE_ALIGN, 0, -1):
                cand = d * LANE_ALIGN
                if dfp % cand:
                    continue
                if (int(_chunked_vmem_estimate(tm, dmp, dfp, cand, cb, xb, ob) * 1.25)
                        + (2 << 20)) <= budget:
                    dcf = cand
                    break
        K = dfp // dcf
        est = _chunked_vmem_estimate(tm, dmp, dfp, dcf, cb, xb, ob)
        vmem_limit = min(budget, max(int(est * 1.25) + (2 << 20), 16 << 20))

        out2d = pl.pallas_call(
            _make_chunked_kernel(d_ff, compute_dtype, K),
            out_shape=jax.ShapeDtypeStruct((Np, dmp), out_dtype),
            grid_spec=pltpu.PrefetchScalarGridSpec(
                num_scalar_prefetch=0,
                grid=(Np // tm, 2 * K),
                in_specs=[
                    # x resident across the j axis (re-fetched only when i changes)
                    pl.BlockSpec((tm, dmp), lambda i, j: (i, 0)),
                    # W1/b1 chunks advance during phase 1, then stay parked
                    pl.BlockSpec((dmp, dcf), lambda i, j: (0, jnp.minimum(j, K - 1))),
                    pl.BlockSpec((1, dcf), lambda i, j: (0, jnp.minimum(j, K - 1))),
                    # gamma/beta/W2 chunks parked during phase 1, advance in phase 2
                    pl.BlockSpec((1, dcf), lambda i, j: (0, jnp.maximum(j - K, 0))),
                    pl.BlockSpec((1, dcf), lambda i, j: (0, jnp.maximum(j - K, 0))),
                    pl.BlockSpec((dcf, dmp), lambda i, j: (jnp.maximum(j - K, 0), 0)),
                    pl.BlockSpec((1, dmp), lambda i, j: (0, 0), **single),   # b2
                ],
                out_specs=pl.BlockSpec((tm, dmp), lambda i, j: (i, 0)),
                scratch_shapes=[
                    pltpu.VMEM((K, tm, dcf), compute_dtype),  # h (all chunks)
                    pltpu.VMEM((tm, 1), jnp.float32),         # s1
                    pltpu.VMEM((tm, 1), jnp.float32),         # s2
                    pltpu.VMEM((tm, dmp), jnp.float32),       # output accumulator
                ],
            ),
            compiler_params=pltpu.CompilerParams(
                dimension_semantics=("parallel", "arbitrary"),
                vmem_limit_bytes=vmem_limit,
            ),
        )(x2d, params.w1, params.b1, params.gamma, params.beta, params.w2, params.b2)

    return out2d[:N, :d_model].reshape(B, S, d_model)


# ----------------------------------------------------------------------------------
# Reference + tests
# ----------------------------------------------------------------------------------
def _reference(x, w1, b1, gamma, beta, w2, b2):
    h = jnp.einsum("bsd,df->bsf", x, w1) + b1
    mu = jnp.mean(h, axis=-1, keepdims=True)
    var = jnp.mean((h - mu) ** 2, axis=-1, keepdims=True)
    hn = (h - mu) / jnp.sqrt(var + LN_EPS) * gamma + beta
    hn = jnp.maximum(hn, 0.0)
    return jnp.einsum("bsf,fd->bsd", hn, w2) + b2


if __name__ == "__main__":
    def make_case(key, B, S, d_model, d_ff):
        kx, kw1, kb1, kw2, kb2, kg, kbe = jax.random.split(key, 7)
        x = jax.random.normal(kx, (B, S, d_model), dtype=jnp.float32)
        w1 = jax.random.normal(kw1, (d_model, d_ff), dtype=jnp.float32) * 0.05
        b1 = jax.random.normal(kb1, (d_ff,), dtype=jnp.float32) * 0.05
        gamma = jnp.ones((d_ff,), jnp.float32) \
            + 0.1 * jax.random.normal(kg, (d_ff,), jnp.float32)
        beta = 0.1 * jax.random.normal(kbe, (d_ff,), jnp.float32)
        w2 = jax.random.normal(kw2, (d_ff, d_model), dtype=jnp.float32) * 0.05
        b2 = jax.random.normal(kb2, (d_model,), dtype=jnp.float32) * 0.05
        return x, w1, b1, gamma, beta, w2, b2

    key = jax.random.PRNGKey(0)
    k1, k2 = jax.random.split(key)

    # --- Case 1: small shape, resident-weights path --------------------------------
    B, S, d_model, d_ff = 2, 8, 32, 64
    x, w1, b1, gamma, beta, w2, b2 = make_case(k1, B, S, d_model, d_ff)
    ref = _reference(x, w1, b1, gamma, beta, w2, b2)

    p_f32 = prepare_ffn_params(w1, b1, gamma, beta, w2, b2, compute_dtype=jnp.float32)
    out = jax.block_until_ready(position_feed_forward_1d(x, p_f32))
    assert out.shape == (B, S, d_model)
    assert jnp.allclose(out, ref, atol=1e-4, rtol=1e-4)

    p_bf16 = prepare_ffn_params(w1, b1, gamma, beta, w2, b2, compute_dtype=jnp.bfloat16)
    out = jax.block_until_ready(position_feed_forward_1d(x, p_bf16))
    assert out.shape == (B, S, d_model)
    assert jnp.allclose(out, ref, atol=3e-2, rtol=3e-2)

    # --- Case 2: force the d_ff-streaming (chunked) path ---------------------------
    B, S, d_model, d_ff = 2, 64, 128, 512
    x, w1, b1, gamma, beta, w2, b2 = make_case(k2, B, S, d_model, d_ff)
    ref = _reference(x, w1, b1, gamma, beta, w2, b2)

    p_f32 = prepare_ffn_params(w1, b1, gamma, beta, w2, b2, compute_dtype=jnp.float32)
    out = jax.block_until_ready(position_feed_forward_1d(x, p_f32, d_ff_chunk=256))
    assert out.shape == (B, S, d_model)
    assert jnp.allclose(out, ref, atol=5e-3, rtol=5e-3)

    p_bf16 = prepare_ffn_params(w1, b1, gamma, beta, w2, b2, compute_dtype=jnp.bfloat16)
    out = jax.block_until_ready(position_feed_forward_1d(x, p_bf16, d_ff_chunk=256))
    assert out.shape == (B, S, d_model)
    assert jnp.allclose(out, ref, atol=5e-2, rtol=5e-2)

    print("KERNEL_OK")
</pallas_src>

<mosaic_0001>
module attributes {stable_mosaic.version = 11 : i64} {
  func.func @kernel(%arg0: i32, %arg1: memref<16x256xf32, #tpu.memory_space<vmem>>, %arg2: memref<256x256xf32, #tpu.memory_space<vmem>>, %arg3: memref<1x256xf32, #tpu.memory_space<vmem>>, %arg4: memref<1x256xf32, #tpu.memory_space<vmem>>, %arg5: memref<1x256xf32, #tpu.memory_space<vmem>>, %arg6: memref<256x256xf32, #tpu.memory_space<vmem>>, %arg7: memref<1x256xf32, #tpu.memory_space<vmem>>, %arg8: memref<16x256xf32, #tpu.memory_space<vmem>>) attributes {dimension_semantics = [#tpu.dimension_semantics<parallel>], iteration_bounds = array<i64: 1>, scalar_prefetch = 0 : i64, scratch_operands = 0 : i64, tpu.core_type = #tpu.core_type<tc>, window_params = [{transform_indices = @transform_0, window_bounds = array<i64: 16, 256>}, {pipeline_mode = #tpu.pipeline_mode<synchronous>, transform_indices = @transform_1, window_bounds = array<i64: 256, 256>}, {pipeline_mode = #tpu.pipeline_mode<synchronous>, transform_indices = @transform_2, window_bounds = array<i64: 1, 256>}, {pipeline_mode = #tpu.pipeline_mode<synchronous>, transform_indices = @transform_3, window_bounds = array<i64: 1, 256>}, {pipeline_mode = #tpu.pipeline_mode<synchronous>, transform_indices = @transform_4, window_bounds = array<i64: 1, 256>}, {pipeline_mode = #tpu.pipeline_mode<synchronous>, transform_indices = @transform_5, window_bounds = array<i64: 256, 256>}, {pipeline_mode = #tpu.pipeline_mode<synchronous>, transform_indices = @transform_6, window_bounds = array<i64: 1, 256>}, {transform_indices = @transform_7, window_bounds = array<i64: 16, 256>}]} {
    %c0 = arith.constant 0 : index
    %c0_0 = arith.constant 0 : index
    %0 = vector.load %arg1[%c0, %c0_0] : memref<16x256xf32, #tpu.memory_space<vmem>>, vector<16x256xf32>
    %c0_1 = arith.constant 0 : index
    %c0_2 = arith.constant 0 : index
    %1 = vector.load %arg2[%c0_1, %c0_2] : memref<256x256xf32, #tpu.memory_space<vmem>>, vector<256x256xf32>
    %cst = arith.constant dense<0.000000e+00> : vector<16x256xf32>
    %2 = tpu.matmul %0, %1, %cst {dimension_numbers = #tpu.dot_dimension_numbers<[1], [0], [0], [1], [0, 0, 1, 1], [], []>} : vector<16x256xf32>, vector<256x256xf32>, vector<16x256xf32> -> vector<16x256xf32>
    %c0_3 = arith.constant 0 : index
    %c0_4 = arith.constant 0 : index
    %3 = vector.load %arg3[%c0_3, %c0_4] : memref<1x256xf32, #tpu.memory_space<vmem>>, vector<1x256xf32>
    %4 = vector.broadcast %3 : vector<1x256xf32> to vector<16x256xf32>
    %5 = arith.addf %2, %4 : vector<16x256xf32>
    %cst_5 = arith.constant dense<0.000000e+00> : vector<16xf32>
    %6 = vector.multi_reduction <add>, %5, %cst_5 [1] : vector<16x256xf32> to vector<16xf32>
    %7 = vector.shape_cast %6 : vector<16xf32> to vector<16x1xf32>
    %8 = arith.mulf %5, %5 : vector<16x256xf32>
    %cst_6 = arith.constant dense<0.000000e+00> : vector<16xf32>
    %9 = vector.multi_reduction <add>, %8, %cst_6 [1] : vector<16x256xf32> to vector<16xf32>
    %10 = vector.shape_cast %9 : vector<16xf32> to vector<16x1xf32>
    %cst_7 = arith.constant 1.562500e-02 : f32
    %11 = vector.broadcast %cst_7 : f32 to vector<16x1xf32>
    %12 = arith.mulf %7, %11 : vector<16x1xf32>
    %cst_8 = arith.constant 1.562500e-02 : f32
    %13 = vector.broadcast %cst_8 : f32 to vector<16x1xf32>
    %14 = arith.mulf %10, %13 : vector<16x1xf32>
    %15 = arith.mulf %12, %12 : vector<16x1xf32>
    %16 = arith.subf %14, %15 : vector<16x1xf32>
    %17 = vector.broadcast %12 : vector<16x1xf32> to vector<16x256xf32>
    %18 = arith.subf %5, %17 : vector<16x256xf32>
    %cst_9 = arith.constant 9.99999974E-6 : f32
    %19 = vector.broadcast %cst_9 : f32 to vector<16x1xf32>
    %20 = arith.addf %16, %19 : vector<16x1xf32>
    %21 = math.rsqrt %20 : vector<16x1xf32>
    %22 = vector.broadcast %21 : vector<16x1xf32> to vector<16x256xf32>
    %23 = arith.mulf %18, %22 : vector<16x256xf32>
    %c0_10 = arith.constant 0 : index
    %c0_11 = arith.constant 0 : index
    %24 = vector.load %arg4[%c0_10, %c0_11] : memref<1x256xf32, #tpu.memory_space<vmem>>, vector<1x256xf32>
    %25 = vector.broadcast %24 : vector<1x256xf32> to vector<16x256xf32>
    %26 = arith.mulf %23, %25 : vector<16x256xf32>
    %c0_12 = arith.constant 0 : index
    %c0_13 = arith.constant 0 : index
    %27 = vector.load %arg5[%c0_12, %c0_13] : memref<1x256xf32, #tpu.memory_space<vmem>>, vector<1x256xf32>
    %28 = vector.broadcast %27 : vector<1x256xf32> to vector<16x256xf32>
    %29 = arith.addf %26, %28 : vector<16x256xf32>
    %cst_14 = arith.constant 0.000000e+00 : f32
    %30 = vector.broadcast %cst_14 : f32 to vector<16x256xf32>
    %31 = arith.maximumf %29, %30 : vector<16x256xf32>
    %c0_15 = arith.constant 0 : index
    %c0_16 = arith.constant 0 : index
    %32 = vector.load %arg6[%c0_15, %c0_16] : memref<256x256xf32, #tpu.memory_space<vmem>>, vector<256x256xf32>
    %cst_17 = arith.constant dense<0.000000e+00> : vector<16x256xf32>
    %33 = tpu.matmul %31, %32, %cst_17 {dimension_numbers = #tpu.dot_dimension_numbers<[1], [0], [0], [1], [0, 0, 1, 1], [], []>} : vector<16x256xf32>, vector<256x256xf32>, vector<16x256xf32> -> vector<16x256xf32>
    %c0_18 = arith.constant 0 : index
    %c0_19 = arith.constant 0 : index
    %34 = vector.load %arg7[%c0_18, %c0_19] : memref<1x256xf32, #tpu.memory_space<vmem>>, vector<1x256xf32>
    %35 = vector.broadcast %34 : vector<1x256xf32> to vector<16x256xf32>
    %36 = arith.addf %33, %35 : vector<16x256xf32>
    %c0_20 = arith.constant 0 : index
    %c0_21 = arith.constant 0 : index
    %37 = vector.load %arg8[%c0_20, %c0_21] : memref<16x256xf32, #tpu.memory_space<vmem>>, vector<16x256xf32>
    tpu.vector_store %arg8[%c0_20, %c0_21], %36 {strides = array<i32>} : memref<16x256xf32, #tpu.memory_space<vmem>>, vector<16x256xf32>,
    return
  }
  func.func @transform_0(%arg0: i32) -> (i32, i32) {
    %c0_i32 = arith.constant 0 : i32
    %c0_i32_0 = arith.constant 0 : i32
    return %arg0, %c0_i32 : i32, i32
  }
  func.func @transform_1(%arg0: i32) -> (i32, i32) {
    %c0_i32 = arith.constant 0 : i32
    %c0_i32_0 = arith.constant 0 : i32
    %c0_i32_1 = arith.constant 0 : i32
    return %c0_i32, %c0_i32_0 : i32, i32
  }
  func.func @transform_2(%arg0: i32) -> (i32, i32) {
    %c0_i32 = arith.constant 0 : i32
    %c0_i32_0 = arith.constant 0 : i32
    %c0_i32_1 = arith.constant 0 : i32
    return %c0_i32, %c0_i32_0 : i32, i32
  }
  func.func @transform_3(%arg0: i32) -> (i32, i32) {
    %c0_i32 = arith.constant 0 : i32
    %c0_i32_0 = arith.constant 0 : i32
    %c0_i32_1 = arith.constant 0 : i32
    return %c0_i32, %c0_i32_0 : i32, i32
  }
  func.func @transform_4(%arg0: i32) -> (i32, i32) {
    %c0_i32 = arith.constant 0 : i32
    %c0_i32_0 = arith.constant 0 : i32
    %c0_i32_1 = arith.constant 0 : i32
    return %c0_i32, %c0_i32_0 : i32, i32
  }
  func.func @transform_5(%arg0: i32) -> (i32, i32) {
    %c0_i32 = arith.constant 0 : i32
    %c0_i32_0 = arith.constant 0 : i32
    %c0_i32_1 = arith.constant 0 : i32
    return %c0_i32, %c0_i32_0 : i32, i32
  }
  func.func @transform_6(%arg0: i32) -> (i32, i32) {
    %c0_i32 = arith.constant 0 : i32
    %c0_i32_0 = arith.constant 0 : i32
    %c0_i32_1 = arith.constant 0 : i32
    return %c0_i32, %c0_i32_0 : i32, i32
  }
  func.func @transform_7(%arg0: i32) -> (i32, i32) {
    %c0_i32 = arith.constant 0 : i32
    %c0_i32_0 = arith.constant 0 : i32
    return %arg0, %c0_i32 : i32, i32
  }
}

</mosaic_0001>

<llo_original>
// kernel: tpu_custom_call.1
$region0: #{tpu_custom_call.1}
  #allocation0 [shape = 'u32[]', space=smem, size = 0x4, offset = 0x4, fixed_abs, tag = 'smem constant byte address 0x4 - core index']
  #allocation1 [shape = 'u32[144,128]{1,0:T(1,128)}', space=vmem, size = 0x12000, scoped, tag = 'internal scratch']
  %s0 = inlined_call_operand.hbm [shape: f32[16,256], index: 0, kind: input, shape index: {}]
  %s1 = inlined_call_operand.hbm [shape: f32[256,256], index: 1, kind: input, shape index: {}]
  %s2 = inlined_call_operand.vmem [shape: f32[1,256], index: 2, kind: input, shape index: {}]
  %s3 = inlined_call_operand.vmem [shape: f32[1,256], index: 3, kind: input, shape index: {}]
  %s4 = inlined_call_operand.vmem [shape: f32[1,256], index: 4, kind: input, shape index: {}]
  %s5 = inlined_call_operand.hbm [shape: f32[256,256], index: 5, kind: input, shape index: {}]
  %s6 = inlined_call_operand.vmem [shape: f32[1,256], index: 6, kind: input, shape index: {}]
  %s7 = inlined_call_operand.hbm [shape: f32[16,256], index: 7, kind: output, shape index: {}]
  %s8 = sld [smem:[#allocation0]]
  $region50: #{tpu_custom_call.1} parent=0
    _
  %s10 = ssub.s32 1, %s8
  %s11 = scalar_select 0, %s10, %s8
  $region1: #{tpu_custom_call.1} parent=0
    #allocation2 [shape = 'u8[16384]{0}', space=vmem, size = 0x4000, scoped, tag = 'input window, operand 0, single buffered']
    #allocation3 [shape = 's32[1]{0}', space=sflag, size = 0x4, scoped, tag = 'scoped memory for tpu_custom_call.1']
    #allocation4 [shape = 's32[1]{0}', space=sflag, size = 0x4, scoped, tag = 'scoped memory for tpu_custom_call.1']
    #allocation5 [shape = 'u8[262144]{0}', space=vmem, size = 0x40000, scoped, tag = 'input window, operand 1, single buffered']
    #allocation6 [shape = 's32[1]{0}', space=sflag, size = 0x4, scoped, tag = 'scoped memory for tpu_custom_call.1']
    #allocation7 [shape = 'u8[262144]{0}', space=vmem, size = 0x40000, scoped, tag = 'input window, operand 5, single buffered']
    #allocation8 [shape = 'u8[16384]{0}', space=vmem, size = 0x4000, scoped, tag = 'output window, operand 0, single buffered']
    %12 = vsyncpa [#allocation3], 0
    %13 = vsyncpa [#allocation6], 0
    %14 = vsyncpa [#allocation4], 0
    // Predicated region
    $region2: #{tpu_custom_call.1} parent=1 // pred_check
      _
    $region3: #{tpu_custom_call.1} parent=1 // pred_check_branch
      %16 = sbr.rel (0) target = $region5
    $region4: #{tpu_custom_call.1} parent=1 // pred_region
      %s18 = ssub.s32 512, 512
      %19 = vsyncadd [#allocation3], %s18
      %s20 = sshll.u32 [#allocation2], 4
      %s21 = int_to_ptr.vmem [resolvable:$true] %s20
      %26 = dma.hbm_to_vmem [thread:$0]  %s0, 512, %s21, [#allocation3], 256, 256, 16
    $region5: #{tpu_custom_call.1} parent=1 // pred_fallthru
      _
    // Predicated region
    $region6: #{tpu_custom_call.1} parent=1 // pred_check
      _
    $region7: #{tpu_custom_call.1} parent=1 // pred_check_branch
      %28 = sbr.rel (0) target = $region9
    $region8: #{tpu_custom_call.1} parent=1 // pred_region
      %s30 = ssub.s32 8192, 8192
      %31 = vsyncadd [#allocation6], %s30
      %s32 = sshll.u32 [#allocation5], 4
      %s33 = int_to_ptr.vmem [resolvable:$true] %s32
      %38 = dma.hbm_to_vmem [thread:$0]  %s1, 8192, %s33, [#allocation6], 256, 256, 16
    $region9: #{tpu_custom_call.1} parent=1 // pred_fallthru
      _
    // Predicated region
    $region10: #{tpu_custom_call.1} parent=1 // pred_check
      _
    $region11: #{tpu_custom_call.1} parent=1 // pred_check_branch
      %40 = sbr.rel (0) target = $region13
    $region12: #{tpu_custom_call.1} parent=1 // pred_region
      _
    $region13: #{tpu_custom_call.1} parent=1 // pred_fallthru
      _
    // Predicated region
    $region14: #{tpu_custom_call.1} parent=1 // pred_check
      _
    $region15: #{tpu_custom_call.1} parent=1 // pred_check_branch
      %42 = sbr.rel (0) target = $region17
    $region16: #{tpu_custom_call.1} parent=1 // pred_region
      _
    $region17: #{tpu_custom_call.1} parent=1 // pred_fallthru
      _
    // Predicated region
    $region18: #{tpu_custom_call.1} parent=1 // pred_check
      _
    $region19: #{tpu_custom_call.1} parent=1 // pred_check_branch
      %44 = sbr.rel (0) target = $region21
    $region20: #{tpu_custom_call.1} parent=1 // pred_region
      _
    $region21: #{tpu_custom_call.1} parent=1 // pred_fallthru
      _
    // Predicated region
    $region22: #{tpu_custom_call.1} parent=1 // pred_check
      _
    $region23: #{tpu_custom_call.1} parent=1 // pred_check_branch
      %46 = sbr.rel (0) target = $region25
    $region24: #{tpu_custom_call.1} parent=1 // pred_region
      %s48 = ssub.s32 8192, 8192
      %49 = vsyncadd [#allocation6], %s48
      %s50 = sshll.u32 [#allocation7], 4
      %s51 = int_to_ptr.vmem [resolvable:$true] %s50
      %56 = dma.hbm_to_vmem [thread:$0]  %s5, 8192, %s51, [#allocation6], 256, 256, 16
    $region25: #{tpu_custom_call.1} parent=1 // pred_fallthru
      _
    // Predicated region
    $region26: #{tpu_custom_call.1} parent=1 // pred_check
      _
    $region27: #{tpu_custom_call.1} parent=1 // pred_check_branch
      %58 = sbr.rel (0) target = $region29
    $region28: #{tpu_custom_call.1} parent=1 // pred_region
      _
    $region29: #{tpu_custom_call.1} parent=1 // pred_fallthru
      _
    // Predicated region
    $region30: #{tpu_custom_call.1} parent=1 // pred_check
      _
    $region31: #{tpu_custom_call.1} parent=1 // pred_check_branch
      %60 = sbr.rel (0) target = $region33
    $region32: #{tpu_custom_call.1} parent=1 // pred_region
      %61 = dma.done [#allocation3], 512
    $region33: #{tpu_custom_call.1} parent=1 // pred_fallthru
      _
    // Predicated region
    $region34: #{tpu_custom_call.1} parent=1 // pred_check
      _
    $region35: #{tpu_custom_call.1} parent=1 // pred_check_branch
      %63 = sbr.rel (0) target = $region37
    $region36: #{tpu_custom_call.1} parent=1 // pred_region
      %64 = dma.done [#allocation6], 8192
    $region37: #{tpu_custom_call.1} parent=1 // pred_fallthru
      _
    // Predicated region
    $region38: #{tpu_custom_call.1} parent=1 // pred_check
      _
    $region39: #{tpu_custom_call.1} parent=1 // pred_check_branch
      %66 = sbr.rel (0) target = $region41
    $region40: #{tpu_custom_call.1} parent=1 // pred_region
      %67 = dma.done [#allocation6], 8192
    $region41: #{tpu_custom_call.1} parent=1 // pred_fallthru
      _
    %v68 = vld [vmem:[#allocation2] sm:$0xff]
    %v69 = vld [vmem:[#allocation2 + $0x8] sm:$0xff]
    %v70 = vld [vmem:[#allocation2 + $0x10] sm:$0xff]
    %v71 = vld [vmem:[#allocation2 + $0x18] sm:$0xff]
    %v72 = vld [vmem:[#allocation5] sm:$0xff]
    %v73 = vld [vmem:[#allocation5 + $0x8] sm:$0xff]
    %v74 = vld [vmem:[#allocation5 + $0x10] sm:$0xff]
    %v75 = vld [vmem:[#allocation5 + $0x18] sm:$0xff]
    %v76 = vld [vmem:[#allocation5 + $0x20] sm:$0xff]
    %v77 = vld [vmem:[#allocation5 + $0x28] sm:$0xff]
    %v78 = vld [vmem:[#allocation5 + $0x30] sm:$0xff]
    %v79 = vld [vmem:[#allocation5 + $0x38] sm:$0xff]
    %v80 = vld [vmem:[#allocation5 + $0x40] sm:$0xff]
    %v81 = vld [vmem:[#allocation5 + $0x48] sm:$0xff]
    %v82 = vld [vmem:[#allocation5 + $0x50] sm:$0xff]
    %v83 = vld [vmem:[#allocation5 + $0x58] sm:$0xff]
    %v84 = vld [vmem:[#allocation5 + $0x60] sm:$0xff]
    %v85 = vld [vmem:[#allocation5 + $0x68] sm:$0xff]
    %v86 = vld [vmem:[#allocation5 + $0x70] sm:$0xff]
    %v87 = vld [vmem:[#allocation5 + $0x78] sm:$0xff]
    %v88 = vld [vmem:[#allocation5 + $0x80] sm:$0xff]
    %v89 = vld [vmem:[#allocation5 + $0x88] sm:$0xff]
    %v90 = vld [vmem:[#allocation5 + $0x90] sm:$0xff]
    %v91 = vld [vmem:[#allocation5 + $0x98] sm:$0xff]
    %v92 = vld [vmem:[#allocation5 + $0xa0] sm:$0xff]
    %v93 = vld [vmem:[#allocation5 + $0xa8] sm:$0xff]
    %v94 = vld [vmem:[#allocation5 + $0xb0] sm:$0xff]
    %v95 = vld [vmem:[#allocation5 + $0xb8] sm:$0xff]
    %v96 = vld [vmem:[#allocation5 + $0xc0] sm:$0xff]
    %v97 = vld [vmem:[#allocation5 + $0xc8] sm:$0xff]
    %v98 = vld [vmem:[#allocation5 + $0xd0] sm:$0xff]
    %v99 = vld [vmem:[#allocation5 + $0xd8] sm:$0xff]
    %v100 = vld [vmem:[#allocation5 + $0xe0] sm:$0xff]
    %v101 = vld [vmem:[#allocation5 + $0xe8] sm:$0xff]
    %v102 = vld [vmem:[#allocation5 + $0xf0] sm:$0xff]
    %v103 = vld [vmem:[#allocation5 + $0xf8] sm:$0xff]
    %v104 = vld [vmem:[#allocation5 + $0x100] sm:$0xff]
    %v105 = vld [vmem:[#allocation5 + $0x108] sm:$0xff]
    %v106 = vld [vmem:[#allocation5 + $0x110] sm:$0xff]
    %v107 = vld [vmem:[#allocation5 + $0x118] sm:$0xff]
    %v108 = vld [vmem:[#allocation5 + $0x120] sm:$0xff]
    %v109 = vld [vmem:[#allocation5 + $0x128] sm:$0xff]
    %v110 = vld [vmem:[#allocation5 + $0x130] sm:$0xff]
    %v111 = vld [vmem:[#allocation5 + $0x138] sm:$0xff]
    %v112 = vld [vmem:[#allocation5 + $0x140] sm:$0xff]
    %v113 = vld [vmem:[#allocation5 + $0x148] sm:$0xff]
    %v114 = vld [vmem:[#allocation5 + $0x150] sm:$0xff]
    %v115 = vld [vmem:[#allocation5 + $0x158] sm:$0xff]
    %v116 = vld [vmem:[#allocation5 + $0x160] sm:$0xff]
    %v117 = vld [vmem:[#allocation5 + $0x168] sm:$0xff]
    %v118 = vld [vmem:[#allocation5 + $0x170] sm:$0xff]
    %v119 = vld [vmem:[#allocation5 + $0x178] sm:$0xff]
    %v120 = vld [vmem:[#allocation5 + $0x180] sm:$0xff]
    %v121 = vld [vmem:[#allocation5 + $0x188] sm:$0xff]
    %v122 = vld [vmem:[#allocation5 + $0x190] sm:$0xff]
    %v123 = vld [vmem:[#allocation5 + $0x198] sm:$0xff]
    %v124 = vld [vmem:[#allocation5 + $0x1a0] sm:$0xff]
    %v125 = vld [vmem:[#allocation5 + $0x1a8] sm:$0xff]
    %v126 = vld [vmem:[#allocation5 + $0x1b0] sm:$0xff]
    %v127 = vld [vmem:[#allocation5 + $0x1b8] sm:$0xff]
    %v128 = vld [vmem:[#allocation5 + $0x1c0] sm:$0xff]
    %v129 = vld [vmem:[#allocation5 + $0x1c8] sm:$0xff]
    %v130 = vld [vmem:[#allocation5 + $0x1d0] sm:$0xff]
    %v131 = vld [vmem:[#allocation5 + $0x1d8] sm:$0xff]
    %v132 = vld [vmem:[#allocation5 + $0x1e0] sm:$0xff]
    %v133 = vld [vmem:[#allocation5 + $0x1e8] sm:$0xff]
    %v134 = vld [vmem:[#allocation5 + $0x1f0] sm:$0xff]
    %v135 = vld [vmem:[#allocation5 + $0x1f8] sm:$0xff]
    %v136 = vld [vmem:[%s2] sm:$0x3]
    %v138 = vlaneseq
    %v139 = vshrl.u32 %v138, 7
    %v140 = vsub.s32 0, %v139
    %v141 = vrot.slane %v136, %v140
    %v142 = vlaneseq
    %v143 = vshrl.u32 %v142, 7
    %v144 = vsub.s32 1, %v143
    %v145 = vrot.slane %v136, %v144
    %148 = vmatprep.subr.mxu0 %v73
    %149 = vmatpush1.msra.mxu0 %v72
    %150 = vmatprep.subr.mxu0 %v75
    %151 = vmatpush1.msra.mxu0 %v74
    %152 = vmatprep.subr.mxu0 %v77
    %153 = vmatpush1.msra.mxu0 %v76
    %154 = vmatprep.subr.mxu0 %v79
    %155 = vmatpush1.msra.mxu0 %v78
    %156 = vmatprep.subr.mxu0 %v81
    %157 = vmatpush1.msra.mxu0 %v80
    %158 = vmatprep.subr.mxu0 %v83
    %159 = vmatpush1.msra.mxu0 %v82
    %160 = vmatprep.subr.mxu0 %v85
    %161 = vmatpush1.msra.mxu0 %v84
    %162 = vmatprep.subr.mxu0 %v87
    %163 = vmatpush1.msra.mxu0 %v86
    %164 = vmatprep.subr.mxu0 %v89
    %165 = vmatpush1.msra.mxu0 %v88
    %166 = vmatprep.subr.mxu0 %v91
    %167 = vmatpush1.msra.mxu0 %v90
    %168 = vmatprep.subr.mxu0 %v93
    %169 = vmatpush1.msra.mxu0 %v92
    %170 = vmatprep.subr.mxu0 %v95
    %171 = vmatpush1.msra.mxu0 %v94
    %172 = vmatprep.subr.mxu0 %v97
    %173 = vmatpush1.msra.mxu0 %v96
    %174 = vmatprep.subr.mxu0 %v99
    %175 = vmatpush1.msra.mxu0 %v98
    %176 = vmatprep.subr.mxu0 %v101
    %177 = vmatpush1.msra.mxu0 %v100
    %178 = vmatprep.subr.mxu0 %v103
    %179 = vmatpush1.msra.mxu0 %v102
    %180 = vmatprep.subr.mxu0 %v105
    %181 = vmatpush1.msra.mxu0 %v104
    %182 = vmatprep.subr.mxu0 %v107
    %183 = vmatpush1.msra.mxu0 %v106
    %184 = vmatprep.subr.mxu0 %v109
    %185 = vmatpush1.msra.mxu0 %v108
    %186 = vmatprep.subr.mxu0 %v111
    %187 = vmatpush1.msra.mxu0 %v110
    %188 = vmatprep.subr.mxu0 %v113
    %189 = vmatpush1.msra.mxu0 %v112
    %190 = vmatprep.subr.mxu0 %v115
    %191 = vmatpush1.msra.mxu0 %v114
    %192 = vmatprep.subr.mxu0 %v117
    %193 = vmatpush1.msra.mxu0 %v116
    %194 = vmatprep.subr.mxu0 %v119
    %195 = vmatpush1.msra.mxu0 %v118
    %196 = vmatprep.subr.mxu0 %v121
    %197 = vmatpush1.msra.mxu0 %v120
    %198 = vmatprep.subr.mxu0 %v123
    %199 = vmatpush1.msra.mxu0 %v122
    %200 = vmatprep.subr.mxu0 %v125
    %201 = vmatpush1.msra.mxu0 %v124
    %202 = vmatprep.subr.mxu0 %v127
    %203 = vmatpush1.msra.mxu0 %v126
    %204 = vmatprep.subr.mxu0 %v129
    %205 = vmatpush1.msra.mxu0 %v128
    %206 = vmatprep.subr.mxu0 %v131
    %207 = vmatpush1.msra.mxu0 %v130
    %208 = vmatprep.subr.mxu0 %v133
    %209 = vmatpush1.msra.mxu0 %v132
    %210 = vmatprep.subr.mxu0 %v135
    %211 = vmatpush1.msra.mxu0 %v134
    %212 = vmatprep.mubr.f32.mxu0 %v69
    %213 = vmatmul.mubr.f32.gmra.mrb[0].mxu0 %v68
    %v214 = vpop.f32.mrb[0].mxu0
    %v215 = vadd.f32 %v141, %v214
    %v216 = vpop.f32.mrb[0].mxu0
    %v217 = vadd.f32 %v145, %v216
    %218 = vmatprep.mubr.f32.mxu0 %v71
    %219 = vmatmul.mubr.f32.gmra.mrb[0].mxu0 %v70
    %v220 = vpop.f32.mrb[0].mxu0
    %v221 = vadd.f32 %v141, %v220
    %v222 = vpop.f32.mrb[0].mxu0
    %v223 = vadd.f32 %v145, %v222
    %224 = vdwg.mxu0
    %v225 = vadd.f32 %v215, %v217
    %226 = vadd.xlane.f32.xlu0 %v225
    %v227 = vpop.xlane.xlu0 %226
    %v228 = vadd.f32 %v221, %v223
    %229 = vadd.xlane.f32.xlu0 %v228
    %v230 = vpop.xlane.xlu0 %229
    %v231 = vmul.f32 %v215, %v215
    %v232 = vmul.f32 %v217, %v217
    %v233 = vmul.f32 %v221, %v221
    %v234 = vmul.f32 %v223, %v223
    %v235 = vadd.f32 %v231, %v232
    %236 = vadd.xlane.f32.xlu0 %v235
    %v237 = vpop.xlane.xlu0 %236
    %v238 = vadd.f32 %v233, %v234
    %239 = vadd.xlane.f32.xlu0 %v238
    %v240 = vpop.xlane.xlu0 %239
    %v241 = vmul.f32 %v227, 0.015625
    %v242 = vmul.f32 %v230, 0.015625
    %v243 = vmul.f32 %v237, 0.015625
    %v244 = vmul.f32 %v240, 0.015625
    %v245 = vmul.f32 %v241, %v241
    %v246 = vmul.f32 %v242, %v242
    %v247 = vsub.f32 %v243, %v245
    %v248 = vsub.f32 %v244, %v246
    %v249 = vsub.f32 %v215, %v241
    %v250 = vsub.f32 %v217, %v241
    %v251 = vsub.f32 %v221, %v242
    %v252 = vsub.f32 %v223, %v242
    %v253 = vadd.f32 %v247, 1e-05
    %v254 = vadd.f32 %v248, 1e-05
    %v255 = vrsqrt.pop %v253
    %v256 = vrsqrt.pop %v254
    %v257 = vmul.f32 %v249, %v255
    %v258 = vmul.f32 %v250, %v255
    %v259 = vmul.f32 %v251, %v256
    %v260 = vmul.f32 %v252, %v256
    %v261 = vld [vmem:[%s3] sm:$0x3]
    %v263 = vlaneseq
    %v264 = vshrl.u32 %v263, 7
    %v265 = vsub.s32 0, %v264
    %v266 = vrot.slane %v261, %v265
    %v267 = vlaneseq
    %v268 = vshrl.u32 %v267, 7
    %v269 = vsub.s32 1, %v268
    %v270 = vrot.slane %v261, %v269
    %v273 = vmul.f32 %v257, %v266
    %v274 = vmul.f32 %v258, %v270
    %v275 = vmul.f32 %v259, %v266
    %v276 = vmul.f32 %v260, %v270
    %v277 = vld [vmem:[%s4] sm:$0x3]
    %v279 = vlaneseq
    %v280 = vshrl.u32 %v279, 7
    %v281 = vsub.s32 0, %v280
    %v282 = vrot.slane %v277, %v281
    %v283 = vlaneseq
    %v284 = vshrl.u32 %v283, 7
    %v285 = vsub.s32 1, %v284
    %v286 = vrot.slane %v277, %v285
    %v289 = vadd.f32 %v273, %v282
    %v290 = vadd.f32 %v274, %v286
    %v291 = vadd.f32 %v275, %v282
    %v292 = vadd.f32 %v276, %v286
    %v293 = vmax.f32 %v289, 0.0
    %v294 = vmax.f32 %v290, 0.0
    %v295 = vmax.f32 %v291, 0.0
    %v296 = vmax.f32 %v292, 0.0
    %v297 = vld [vmem:[#allocation7] sm:$0xff]
    %v298 = vld [vmem:[#allocation7 + $0x8] sm:$0xff]
    %v299 = vld [vmem:[#allocation7 + $0x10] sm:$0xff]
    %v300 = vld [vmem:[#allocation7 + $0x18] sm:$0xff]
    %v301 = vld [vmem:[#allocation7 + $0x20] sm:$0xff]
    %v302 = vld [vmem:[#allocation7 + $0x28] sm:$0xff]
    %v303 = vld [vmem:[#allocation7 + $0x30] sm:$0xff]
    %v304 = vld [vmem:[#allocation7 + $0x38] sm:$0xff]
    %v305 = vld [vmem:[#allocation7 + $0x40] sm:$0xff]
    %v306 = vld [vmem:[#allocation7 + $0x48] sm:$0xff]
    %v307 = vld [vmem:[#allocation7 + $0x50] sm:$0xff]
    %v308 = vld [vmem:[#allocation7 + $0x58] sm:$0xff]
    %v309 = vld [vmem:[#allocation7 + $0x60] sm:$0xff]
    %v310 = vld [vmem:[#allocation7 + $0x68] sm:$0xff]
    %v311 = vld [vmem:[#allocation7 + $0x70] sm:$0xff]
    %v312 = vld [vmem:[#allocation7 + $0x78] sm:$0xff]
    %v313 = vld [vmem:[#allocation7 + $0x80] sm:$0xff]
    %v314 = vld [vmem:[#allocation7 + $0x88] sm:$0xff]
    %v315 = vld [vmem:[#allocation7 + $0x90] sm:$0xff]
    %v316 = vld [vmem:[#allocation7 + $0x98] sm:$0xff]
    %v317 = vld [vmem:[#allocation7 + $0xa0] sm:$0xff]
    %v318 = vld [vmem:[#allocation7 + $0xa8] sm:$0xff]
    %v319 = vld [vmem:[#allocation7 + $0xb0] sm:$0xff]
    %v320 = vld [vmem:[#allocation7 + $0xb8] sm:$0xff]
    %v321 = vld [vmem:[#allocation7 + $0xc0] sm:$0xff]
    %v322 = vld [vmem:[#allocation7 + $0xc8] sm:$0xff]
    %v323 = vld [vmem:[#allocation7 + $0xd0] sm:$0xff]
    %v324 = vld [vmem:[#allocation7 + $0xd8] sm:$0xff]
    %v325 = vld [vmem:[#allocation7 + $0xe0] sm:$0xff]
    %v326 = vld [vmem:[#allocation7 + $0xe8] sm:$0xff]
    %v327 = vld [vmem:[#allocation7 + $0xf0] sm:$0xff]
    %v328 = vld [vmem:[#allocation7 + $0xf8] sm:$0xff]
    %v329 = vld [vmem:[#allocation7 + $0x100] sm:$0xff]
    %v330 = vld [vmem:[#allocation7 + $0x108] sm:$0xff]
    %v331 = vld [vmem:[#allocation7 + $0x110] sm:$0xff]
    %v332 = vld [vmem:[#allocation7 + $0x118] sm:$0xff]
    %v333 = vld [vmem:[#allocation7 + $0x120] sm:$0xff]
    %v334 = vld [vmem:[#allocation7 + $0x128] sm:$0xff]
    %v335 = vld [vmem:[#allocation7 + $0x130] sm:$0xff]
    %v336 = vld [vmem:[#allocation7 + $0x138] sm:$0xff]
    %v337 = vld [vmem:[#allocation7 + $0x140] sm:$0xff]
    %v338 = vld [vmem:[#allocation7 + $0x148] sm:$0xff]
    %v339 = vld [vmem:[#allocation7 + $0x150] sm:$0xff]
    %v340 = vld [vmem:[#allocation7 + $0x158] sm:$0xff]
    %v341 = vld [vmem:[#allocation7 + $0x160] sm:$0xff]
    %v342 = vld [vmem:[#allocation7 + $0x168] sm:$0xff]
    %v343 = vld [vmem:[#allocation7 + $0x170] sm:$0xff]
    %v344 = vld [vmem:[#allocation7 + $0x178] sm:$0xff]
    %v345 = vld [vmem:[#allocation7 + $0x180] sm:$0xff]
    %v346 = vld [vmem:[#allocation7 + $0x188] sm:$0xff]
    %v347 = vld [vmem:[#allocation7 + $0x190] sm:$0xff]
    %v348 = vld [vmem:[#allocation7 + $0x198] sm:$0xff]
    %v349 = vld [vmem:[#allocation7 + $0x1a0] sm:$0xff]
    %v350 = vld [vmem:[#allocation7 + $0x1a8] sm:$0xff]
    %v351 = vld [vmem:[#allocation7 + $0x1b0] sm:$0xff]
    %v352 = vld [vmem:[#allocation7 + $0x1b8] sm:$0xff]
    %v353 = vld [vmem:[#allocation7 + $0x1c0] sm:$0xff]
    %v354 = vld [vmem:[#allocation7 + $0x1c8] sm:$0xff]
    %v355 = vld [vmem:[#allocation7 + $0x1d0] sm:$0xff]
    %v356 = vld [vmem:[#allocation7 + $0x1d8] sm:$0xff]
    %v357 = vld [vmem:[#allocation7 + $0x1e0] sm:$0xff]
    %v358 = vld [vmem:[#allocation7 + $0x1e8] sm:$0xff]
    %v359 = vld [vmem:[#allocation7 + $0x1f0] sm:$0xff]
    %v360 = vld [vmem:[#allocation7 + $0x1f8] sm:$0xff]
    %v361 = vld [vmem:[%s6] sm:$0x3]
    %v363 = vlaneseq
    %v364 = vshrl.u32 %v363, 7
    %v365 = vsub.s32 0, %v364
    %v366 = vrot.slane %v361, %v365
    %v367 = vlaneseq
    %v368 = vshrl.u32 %v367, 7
    %v369 = vsub.s32 1, %v368
    %v370 = vrot.slane %v361, %v369
    %373 = vmatprep.subr.mxu0 %v298
    %374 = vmatpush1.msra.mxu0 %v297
    %375 = vmatprep.subr.mxu0 %v300
    %376 = vmatpush1.msra.mxu0 %v299
    %377 = vmatprep.subr.mxu0 %v302
    %378 = vmatpush1.msra.mxu0 %v301
    %379 = vmatprep.subr.mxu0 %v304
    %380 = vmatpush1.msra.mxu0 %v303
    %381 = vmatprep.subr.mxu0 %v306
    %382 = vmatpush1.msra.mxu0 %v305
    %383 = vmatprep.subr.mxu0 %v308
    %384 = vmatpush1.msra.mxu0 %v307
    %385 = vmatprep.subr.mxu0 %v310
    %386 = vmatpush1.msra.mxu0 %v309
    %387 = vmatprep.subr.mxu0 %v312
    %388 = vmatpush1.msra.mxu0 %v311
    %389 = vmatprep.subr.mxu0 %v314
    %390 = vmatpush1.msra.mxu0 %v313
    %391 = vmatprep.subr.mxu0 %v316
    %392 = vmatpush1.msra.mxu0 %v315
    %393 = vmatprep.subr.mxu0 %v318
    %394 = vmatpush1.msra.mxu0 %v317
    %395 = vmatprep.subr.mxu0 %v320
    %396 = vmatpush1.msra.mxu0 %v319
    %397 = vmatprep.subr.mxu0 %v322
    %398 = vmatpush1.msra.mxu0 %v321
    %399 = vmatprep.subr.mxu0 %v324
    %400 = vmatpush1.msra.mxu0 %v323
    %401 = vmatprep.subr.mxu0 %v326
    %402 = vmatpush1.msra.mxu0 %v325
    %403 = vmatprep.subr.mxu0 %v328
    %404 = vmatpush1.msra.mxu0 %v327
    %405 = vmatprep.subr.mxu0 %v330
    %406 = vmatpush1.msra.mxu0 %v329
    %407 = vmatprep.subr.mxu0 %v332
    %408 = vmatpush1.msra.mxu0 %v331
    %409 = vmatprep.subr.mxu0 %v334
    %410 = vmatpush1.msra.mxu0 %v333
    %411 = vmatprep.subr.mxu0 %v336
    %412 = vmatpush1.msra.mxu0 %v335
    %413 = vmatprep.subr.mxu0 %v338
    %414 = vmatpush1.msra.mxu0 %v337
    %415 = vmatprep.subr.mxu0 %v340
    %416 = vmatpush1.msra.mxu0 %v339
    %417 = vmatprep.subr.mxu0 %v342
    %418 = vmatpush1.msra.mxu0 %v341
    %419 = vmatprep.subr.mxu0 %v344
    %420 = vmatpush1.msra.mxu0 %v343
    %421 = vmatprep.subr.mxu0 %v346
    %422 = vmatpush1.msra.mxu0 %v345
    %423 = vmatprep.subr.mxu0 %v348
    %424 = vmatpush1.msra.mxu0 %v347
    %425 = vmatprep.subr.mxu0 %v350
    %426 = vmatpush1.msra.mxu0 %v349
    %427 = vmatprep.subr.mxu0 %v352
    %428 = vmatpush1.msra.mxu0 %v351
    %429 = vmatprep.subr.mxu0 %v354
    %430 = vmatpush1.msra.mxu0 %v353
    %431 = vmatprep.subr.mxu0 %v356
    %432 = vmatpush1.msra.mxu0 %v355
    %433 = vmatprep.subr.mxu0 %v358
    %434 = vmatpush1.msra.mxu0 %v357
    %435 = vmatprep.subr.mxu0 %v360
    %436 = vmatpush1.msra.mxu0 %v359
    %437 = vmatprep.mubr.f32.mxu0 %v294
    %438 = vmatmul.mubr.f32.gmra.mrb[0].mxu0 %v293
    %v439 = vpop.f32.mrb[0].mxu0
    %v440 = vadd.f32 %v366, %v439
    %v441 = vpop.f32.mrb[0].mxu0
    %v442 = vadd.f32 %v370, %v441
    %443 = vmatprep.mubr.f32.mxu0 %v296
    %444 = vmatmul.mubr.f32.gmra.mrb[0].mxu0 %v295
    %v445 = vpop.f32.mrb[0].mxu0
    %v446 = vadd.f32 %v366, %v445
    %v447 = vpop.f32.mrb[0].mxu0
    %v448 = vadd.f32 %v370, %v447
    %449 = vdwg.mxu0
    %450 = vst [vmem:[#allocation8] sm:$0xff] %v440
    %451 = vst [vmem:[#allocation8 + $0x8] sm:$0xff] %v442
    %452 = vst [vmem:[#allocation8 + $0x10] sm:$0xff] %v446
    %453 = vst [vmem:[#allocation8 + $0x18] sm:$0xff] %v448
    // Predicated region
    $region42: #{tpu_custom_call.1} parent=1 // pred_check
      _
    $region43: #{tpu_custom_call.1} parent=1 // pred_check_branch
      %455 = sbr.rel (0) target = $region45
    $region44: #{tpu_custom_call.1} parent=1 // pred_region
      %s457 = ssub.s32 512, 512
      %458 = vsyncadd [#allocation4], %s457
      %s459 = sshll.u32 [#allocation8], 4
      %s460 = int_to_ptr.vmem [resolvable:$true] %s459
      %465 = dma.vmem_to_hbm [thread:$0]  %s460, 512, %s7, [#allocation4], 256, 256, 16
    $region45: #{tpu_custom_call.1} parent=1 // pred_fallthru
      _
    // Predicated region
    $region46: #{tpu_custom_call.1} parent=1 // pred_check
      _
    $region47: #{tpu_custom_call.1} parent=1 // pred_check_branch
      %467 = sbr.rel (0) target = $region49
    $region48: #{tpu_custom_call.1} parent=1 // pred_region
      %468 = dma.done [#allocation4], 512
    $region49: #{tpu_custom_call.1} parent=1 // pred_fallthru
      _
    %469 = vsyncpa [#allocation3], 1
    %470 = vsyncpa [#allocation6], 1
    %471 = vsyncpa [#allocation4], 1

</llo_original>
